<compile_context>
chip_gen: v5e
topology: v5e:2x2
jax: 0.10.0
libtpu: 0.0.40
codegen_flags: <defaults>
</compile_context>

<pallas_src>
import functools

import jax
import jax.numpy as jnp
from jax.experimental import pallas as pl
from jax.experimental.pallas import tpu as pltpu

# TODO(synk): the `conformer` sub-module is an external, undefined component of
# the spec; this kernel implements the classifier head (mean over dim=1 +
# nn.Linear) on the conformer's output features.


def _pool_linear_kernel(x_ref, w_ref, b_ref, o_ref, acc_ref, *,
                        inv_t, valid_t_last, sub, preadd):
    # x_ref:   (TILE_B, TILE_T, D)   input features (native dtype, cast in-kernel)
    # w_ref:   (D, L)                linear weight, transposed (classes on lanes)
    # b_ref:   (1, L)                bias
    # o_ref:   (TILE_B, L)           logits
    # acc_ref: (TILE_B, sub, D) f32  running partial sums over time
    t = pl.program_id(1)
    nt = pl.num_programs(1)
    tile_t = x_ref.shape[1]

    @pl.when(t == 0)
    def _():
        acc_ref[...] = jnp.zeros_like(acc_ref)

    def _accumulate(xv):
        tb, tt, d = xv.shape
        if sub == 8:
            xg = xv.reshape(tb, tt // 8, 8, d)
            if preadd and (tt // 8) % 2 == 0 and (tt // 8) > 1:
                # One pairwise add in the native (bf16) dtype before the f32
                # cast: halves the cast + f32-add work; exact for masked zeros.
                xp = xg.reshape(tb, tt // 16, 2, 8, d)
                xg = xp[:, :, 0] + xp[:, :, 1]
            # Pure vreg adds: sublane collapse is deferred to the finalize step.
            acc_ref[...] += jnp.sum(xg.astype(jnp.float32), axis=1)
        else:
            acc_ref[...] += jnp.sum(xv.astype(jnp.float32), axis=1, keepdims=True)

    if valid_t_last == tile_t:
        _accumulate(x_ref[...])
    else:
        # Ragged final T tile: mask out-of-range frames only on the last step;
        # every other step stays on the unmasked hot path.
        @pl.when(t < nt - 1)
        def _():
            _accumulate(x_ref[...])

        @pl.when(t == nt - 1)
        def _():
            xv = x_ref[...]
            frame = jax.lax.broadcasted_iota(jnp.int32, xv.shape, 1)
            _accumulate(jnp.where(frame < valid_t_last, xv, jnp.zeros_like(xv)))

    @pl.when(t == nt - 1)
    def _():
        pooled = jnp.sum(acc_ref[...], axis=1) * inv_t                 # (TILE_B, D)
        logits = jnp.dot(pooled, w_ref[...].astype(jnp.float32),
                         preferred_element_type=jnp.float32)           # (TILE_B, L)
        logits = logits + b_ref[...].astype(jnp.float32)
        o_ref[...] = logits.astype(o_ref.dtype)


def _pick_tile_b(B, cap=128):
    """Multiple-of-8 batch tile, aiming for >= 2 batch tiles (v7x megacore) and,
    when possible, an exact divisor of B (no ragged batch tile)."""
    if B <= 8:
        return B
    target = min(cap, ((B + 1) // 2 + 7) // 8 * 8)
    for cand in range(target, 7, -8):
        if B % cand == 0:
            return cand
    return target


def emotion_classifier_forward(x, weight, bias, *, tile_b=None, tile_t=None,
                               bf16_pairwise_preadd=None, out_dtype=None):
    """Fused mean-pool (dim=1) + linear head.

    x:      (B, T, D) conformer output features (f32 or bf16)
    weight: (L, D)    nn.Linear weight
    bias:   (L,)      nn.Linear bias
    Returns logits of shape (B, L) in x.dtype (or `out_dtype` if given).
    """
    B, T, D = x.shape
    L = weight.shape[0]
    out_dtype = x.dtype if out_dtype is None else out_dtype
    x_bytes = jnp.dtype(x.dtype).itemsize

    # Generation-aware VMEM capacity (128 MiB v5e/v6e, 64 MiB per core on v7x).
    try:
        vmem_cap = int(pltpu.get_tpu_info().vmem_capacity_bytes)
    except Exception:
        vmem_cap = 64 * 1024 * 1024

    auto_b = tile_b is None
    if auto_b:
        tile_b = _pick_tile_b(B)

    if tile_t is None:
        budget_total = int(vmem_cap * 0.70)

        def x_budget(tb):
            fixed = tb * 8 * D * 4 + 2 * (D * L + L + tb * L) * 4 + (1 << 20)
            return budget_total - fixed

        if auto_b:
            # Very large D: shrink tile_b so a minimal double-buffered x tile fits.
            while tile_b > 8 and 2 * tile_b * 8 * D * x_bytes > max(x_budget(tile_b), 0):
                tile_b = max(8, (tile_b // 2 + 7) // 8 * 8)

        bx = max(x_budget(tile_b), 2 * tile_b * 8 * D * x_bytes)
        tile_t = bx // (2 * tile_b * D * x_bytes)
        tile_t = T if tile_t >= T else max(8, (tile_t // 8) * 8)
    else:
        tile_t = min(tile_t, T)
        if tile_t < T and T >= 8:
            tile_t = max(8, (tile_t // 8) * 8)

    sub = 8 if (tile_t >= 8 and tile_t % 8 == 0) else 1

    if bf16_pairwise_preadd is None:
        try:
            kind = jax.devices()[0].device_kind.lower()
            # Chips before v6e have no bf16 VPU; keep the pure-f32 path there.
            bf16_pairwise_preadd = not any(v in kind for v in ("v2", "v3", "v4", "v5"))
        except Exception:
            bf16_pairwise_preadd = False
    preadd = bool(bf16_pairwise_preadd) and x.dtype == jnp.bfloat16 and sub == 8

    grid = (pl.cdiv(B, tile_b), pl.cdiv(T, tile_t))
    valid_t_last = int(T - (grid[1] - 1) * tile_t)

    w_t = weight.T                      # (D, L): classes on the lane axis
    b2d = bias.reshape(1, L)

    # Scoped-VMEM limit: what this call actually needs (double-buffered x tile,
    # accumulator, small operands) plus margin, capped below physical capacity.
    w_bytes = jnp.dtype(w_t.dtype).itemsize
    o_bytes = jnp.dtype(out_dtype).itemsize
    needed = (2 * tile_b * tile_t * D * x_bytes
              + tile_b * sub * D * 4
              + 2 * (D * L * w_bytes + L * w_bytes + tile_b * L * o_bytes)
              + (4 << 20))
    vmem_limit = int(min(vmem_cap * 0.9, max(needed, 32 << 20)))

    kernel = functools.partial(
        _pool_linear_kernel, inv_t=1.0 / float(T), valid_t_last=valid_t_last,
        sub=sub, preadd=preadd)

    flops = B * T * D + 2 * B * D * L
    bytes_accessed = (B * T * D * x_bytes + D * L * w_bytes + L * w_bytes
                      + B * L * o_bytes)

    return pl.pallas_call(
        kernel,
        out_shape=jax.ShapeDtypeStruct((B, L), out_dtype),
        grid_spec=pltpu.PrefetchScalarGridSpec(
            num_scalar_prefetch=0,
            grid=grid,
            in_specs=[
                pl.BlockSpec((tile_b, tile_t, D), lambda b, t: (b, t, 0)),
                pl.BlockSpec((D, L), lambda b, t: (0, 0)),
                pl.BlockSpec((1, L), lambda b, t: (0, 0)),
            ],
            out_specs=pl.BlockSpec((tile_b, L), lambda b, t: (b, 0)),
            scratch_shapes=[pltpu.VMEM((tile_b, sub, D), jnp.float32)],
        ),
        compiler_params=pltpu.CompilerParams(
            dimension_semantics=("parallel", "arbitrary"),
            vmem_limit_bytes=vmem_limit,
        ),
        cost_estimate=pl.CostEstimate(
            flops=flops, transcendentals=0, bytes_accessed=bytes_accessed),
    )(x, w_t, b2d)


def _reference(x, weight, bias):
    pooled = jnp.mean(x.astype(jnp.float32), axis=1)
    return pooled @ weight.astype(jnp.float32).T + bias.astype(jnp.float32)


if __name__ == "__main__":
    key = jax.random.PRNGKey(0)
    k1, k2, k3, k4 = jax.random.split(key, 4)

    # --- main check: shapes divide the tiles exactly, 2-step T reduction ---
    B, T, D = 2, 16, 32      # batch, sequence (conformer output frames), model dim
    L = 4                    # num_labels (emotion classes)

    x = jax.random.normal(k1, (B, T, D), dtype=jnp.float32)   # conformer output feats
    weight = jax.random.normal(k2, (L, D), dtype=jnp.float32) * 0.1
    bias = jax.random.normal(k3, (L,), dtype=jnp.float32) * 0.1

    logits = jax.block_until_ready(
        emotion_classifier_forward(x, weight, bias, tile_t=8))
    ref = _reference(x, weight, bias)
    assert logits.shape == (B, L), logits.shape
    assert jnp.allclose(logits, ref, atol=1e-5, rtol=1e-5), (logits, ref)

    # --- ragged check: B and T not divisible by the tiles, no wrapper padding ---
    B2, T2 = 10, 20
    x2 = jax.random.normal(k4, (B2, T2, D), dtype=jnp.float32)
    logits2 = jax.block_until_ready(
        emotion_classifier_forward(x2, weight, bias, tile_t=8))
    ref2 = _reference(x2, weight, bias)
    assert logits2.shape == (B2, L), logits2.shape
    assert jnp.allclose(logits2, ref2, atol=1e-5, rtol=1e-5), (logits2, ref2)

    # --- bf16 input path (exercises the pairwise pre-add on v6e/v7x) ---
    xb = x2.astype(jnp.bfloat16)
    logits3 = jax.block_until_ready(
        emotion_classifier_forward(xb, weight, bias, tile_t=16,
                                   out_dtype=jnp.float32))
    ref3 = _reference(xb, weight, bias)
    assert jnp.allclose(logits3, ref3, atol=2e-2, rtol=2e-2), (logits3, ref3)

    print("KERNEL_OK")
</pallas_src>

<mosaic_0001>
module attributes {stable_mosaic.version = 11 : i64} {
  func.func @_pool_linear_kernel(%arg0: i32, %arg1: i32, %arg2: memref<2x8x32xf32, #tpu.memory_space<vmem>>, %arg3: memref<32x4xf32, #tpu.memory_space<vmem>>, %arg4: memref<1x4xf32, #tpu.memory_space<vmem>>, %arg5: memref<2x4xf32, #tpu.memory_space<vmem>>, %arg6: memref<2x8x32xf32, #tpu.memory_space<vmem>>) attributes {dimension_semantics = [#tpu.dimension_semantics<parallel>, #tpu.dimension_semantics<arbitrary>], iteration_bounds = array<i64: 1, 2>, scalar_prefetch = 0 : i64, scratch_operands = 1 : i64, tpu.core_type = #tpu.core_type<tc>, window_params = [{transform_indices = @transform_0, window_bounds = array<i64: 2, 8, 32>}, {pipeline_mode = #tpu.pipeline_mode<synchronous>, transform_indices = @transform_1, window_bounds = array<i64: 32, 4>}, {pipeline_mode = #tpu.pipeline_mode<synchronous>, transform_indices = @transform_2, window_bounds = array<i64: 1, 4>}, {transform_indices = @transform_3, window_bounds = array<i64: 2, 4>}]} {
    %c0_i32 = arith.constant 0 : i32
    %0 = arith.cmpi eq, %arg1, %c0_i32 : i32
    %1 = arith.extui %0 : i1 to i32
    %c0_i32_0 = arith.constant 0 : i32
    %2 = arith.cmpi ne, %1, %c0_i32_0 : i32
    scf.if %2 {
      %cst_10 = arith.constant 0.000000e+00 : f32
      %12 = vector.broadcast %cst_10 : f32 to vector<2x8x32xf32>
      %c0_11 = arith.constant 0 : index
      %c0_12 = arith.constant 0 : index
      %c0_13 = arith.constant 0 : index
      %13 = vector.load %arg6[%c0_11, %c0_12, %c0_13] : memref<2x8x32xf32, #tpu.memory_space<vmem>>, vector<2x8x32xf32>
      tpu.vector_store %arg6[%c0_11, %c0_12, %c0_13], %12 {strides = array<i32>} : memref<2x8x32xf32, #tpu.memory_space<vmem>>, vector<2x8x32xf32>,
    } else {
    }
    %c0 = arith.constant 0 : index
    %c0_1 = arith.constant 0 : index
    %c0_2 = arith.constant 0 : index
    %3 = vector.load %arg2[%c0, %c0_1, %c0_2] : memref<2x8x32xf32, #tpu.memory_space<vmem>>, vector<2x8x32xf32>
    %4 = vector.shape_cast %3 : vector<2x8x32xf32> to vector<2x1x8x32xf32>
    %c0_3 = arith.constant 0 : index
    %c0_4 = arith.constant 0 : index
    %c0_5 = arith.constant 0 : index
    %5 = vector.load %arg6[%c0_3, %c0_4, %c0_5] : memref<2x8x32xf32, #tpu.memory_space<vmem>>, vector<2x8x32xf32>
    %cst = arith.constant dense<0.000000e+00> : vector<2x8x32xf32>
    %6 = vector.multi_reduction <add>, %4, %cst [1] : vector<2x1x8x32xf32> to vector<2x8x32xf32>
    %7 = arith.addf %5, %6 : vector<2x8x32xf32>
    %c0_6 = arith.constant 0 : index
    %c0_7 = arith.constant 0 : index
    %c0_8 = arith.constant 0 : index
    %8 = vector.load %arg6[%c0_6, %c0_7, %c0_8] : memref<2x8x32xf32, #tpu.memory_space<vmem>>, vector<2x8x32xf32>
    tpu.vector_store %arg6[%c0_6, %c0_7, %c0_8], %7 {strides = array<i32>} : memref<2x8x32xf32, #tpu.memory_space<vmem>>, vector<2x8x32xf32>,
    %c1_i32 = arith.constant 1 : i32
    %9 = arith.cmpi eq, %arg1, %c1_i32 : i32
    %10 = arith.extui %9 : i1 to i32
    %c0_i32_9 = arith.constant 0 : i32
    %11 = arith.cmpi ne, %10, %c0_i32_9 : i32
    scf.if %11 {
      %c0_10 = arith.constant 0 : index
      %c0_11 = arith.constant 0 : index
      %c0_12 = arith.constant 0 : index
      %12 = vector.load %arg6[%c0_10, %c0_11, %c0_12] : memref<2x8x32xf32, #tpu.memory_space<vmem>>, vector<2x8x32xf32>
      %cst_13 = arith.constant dense<0.000000e+00> : vector<2x32xf32>
      %13 = vector.multi_reduction <add>, %12, %cst_13 [1] : vector<2x8x32xf32> to vector<2x32xf32>
      %cst_14 = arith.constant 6.250000e-02 : f32
      %14 = vector.broadcast %cst_14 : f32 to vector<2x32xf32>
      %15 = arith.mulf %13, %14 : vector<2x32xf32>
      %c0_15 = arith.constant 0 : index
      %c0_16 = arith.constant 0 : index
      %16 = vector.load %arg3[%c0_15, %c0_16] : memref<32x4xf32, #tpu.memory_space<vmem>>, vector<32x4xf32>
      %cst_17 = arith.constant dense<0.000000e+00> : vector<2x4xf32>
      %17 = tpu.matmul %15, %16, %cst_17 {dimension_numbers = #tpu.dot_dimension_numbers<[1], [0], [0], [1], [0, 0, 1, 1], [], []>} : vector<2x32xf32>, vector<32x4xf32>, vector<2x4xf32> -> vector<2x4xf32>
      %c0_18 = arith.constant 0 : index
      %c0_19 = arith.constant 0 : index
      %18 = vector.load %arg4[%c0_18, %c0_19] : memref<1x4xf32, #tpu.memory_space<vmem>>, vector<1x4xf32>
      %19 = vector.broadcast %18 : vector<1x4xf32> to vector<2x4xf32>
      %20 = arith.addf %17, %19 : vector<2x4xf32>
      %c0_20 = arith.constant 0 : index
      %c0_21 = arith.constant 0 : index
      %21 = vector.load %arg5[%c0_20, %c0_21] : memref<2x4xf32, #tpu.memory_space<vmem>>, vector<2x4xf32>
      tpu.vector_store %arg5[%c0_20, %c0_21], %20 {strides = array<i32>} : memref<2x4xf32, #tpu.memory_space<vmem>>, vector<2x4xf32>,
    } else {
    }
    return
  }
  func.func @transform_0(%arg0: i32, %arg1: i32) -> (i32, i32, i32) {
    %c0_i32 = arith.constant 0 : i32
    %c0_i32_0 = arith.constant 0 : i32
    return %arg0, %arg1, %c0_i32 : i32, i32, i32
  }
  func.func @transform_1(%arg0: i32, %arg1: i32) -> (i32, i32) {
    %c0_i32 = arith.constant 0 : i32
    %c0_i32_0 = arith.constant 0 : i32
    %c0_i32_1 = arith.constant 0 : i32
    return %c0_i32, %c0_i32_0 : i32, i32
  }
  func.func @transform_2(%arg0: i32, %arg1: i32) -> (i32, i32) {
    %c0_i32 = arith.constant 0 : i32
    %c0_i32_0 = arith.constant 0 : i32
    %c0_i32_1 = arith.constant 0 : i32
    return %c0_i32, %c0_i32_0 : i32, i32
  }
  func.func @transform_3(%arg0: i32, %arg1: i32) -> (i32, i32) {
    %c0_i32 = arith.constant 0 : i32
    %c0_i32_0 = arith.constant 0 : i32
    return %arg0, %c0_i32 : i32, i32
  }
}

</mosaic_0001>

<llo_original>
// kernel: tpu_custom_call.1
$region0: #{tpu_custom_call.1}
  #allocation0 [shape = 'u32[]', space=smem, size = 0x4, offset = 0x4, fixed_abs, tag = 'smem constant byte address 0x4 - core index']
  #allocation1 [shape = 'u32[72,128]{1,0:T(1,128)}', space=vmem, size = 0x9000, scoped, tag = 'internal scratch']
  #allocation2 [shape = 'f32[2,8,32]{2,1,0:T(8,128)}', space=vmem, size = 0x2000, scoped, tag = 'scratch operand']
  %s0 = inlined_call_operand.vmem [shape: f32[2,16,32], index: 0, kind: input, shape index: {}]
  %s1 = inlined_call_operand.vmem [shape: f32[32,4], index: 1, kind: input, shape index: {}]
  %s2 = inlined_call_operand.vmem [shape: f32[1,4], index: 2, kind: input, shape index: {}]
  %s3 = inlined_call_operand.hbm [shape: f32[2,4], index: 3, kind: output, shape index: {}]
  %s4 = sld [smem:[#allocation0]]
  $region91: #{tpu_custom_call.1} parent=0
    _
  %s6 = ssub.s32 1, %s4
  %s7 = scalar_select 0, %s6, %s4
  $region1: #{tpu_custom_call.1} parent=0
    #allocation3 [shape = 'u8[16384]{0}', space=vmem, size = 0x4000, scoped, tag = 'input window, operand 0']
    #allocation4 [shape = 'u8[1024]{0}', space=vmem, size = 0x400, scoped, tag = 'output window, operand 0, single buffered']
    #allocation5 [shape = 's32[2]{0}', space=sflag, size = 0x8, scoped, tag = 'scoped memory for tpu_custom_call.1']
    %8 = vsyncpa [#allocation5], 0
    loop: start=0, step=1, limit=4
    $region2: #{tpu_custom_call.1} parent=1 // loop_pre_header
      _
    $region3: #{tpu_custom_call.1} parent=1 // loop_header
      %s10 = sphi 0, %s14
      %p11 = scmp.ge.s32.totalorder %s10, 4
      %s17 = sphi 0, %s29
      %s18 = sphi 0, %s25
      %s19 = sphi 0, %s17
      %s20 = sphi 0, %s18
      %s21 = sphi 0, %s19
      %s22 = sphi 0, %s20
      %s34 = sphi 0, %s36
      %s37 = sphi 0, %s34
      %s38 = sphi 0, %s37
      %s54 = sphi 0, %s38
      %s58 = sphi 0, %s58
      %s60 = sphi 0, %s58
      %s61 = sphi 0, %s60
      %s75 = sphi 0, %s61
      %s79 = sphi 0, %s79
      %s81 = sphi 0, %s79
      %s82 = sphi 0, %s81
      %s96 = sphi 0, %s82
      %s102 = sphi 0, %s104
      %s105 = sphi 0, %s102
      %s106 = sphi 0, %s105
      %s122 = sphi 0, %s106
    $region4: #{tpu_custom_call.1} parent=1 // loop_header_branch
      %13 = sbr.rel (%p11) target = $region8
    $region5: #{tpu_custom_call.1} parent=1 // loop_body
      %s15 = ssub.s32 %s10, 1
      %s16 = ssub.s32 %s10, 2
      %s23 = sadd.s32 1, %s18
      %p24 = scmp.ge.s32.totalorder %s23, 2
      %s25 = scalar_select %p24, 0, %s23
      %s26 = sadd.s32 1, %s17
      %s27 = scalar_select %p24, %s26, %s17
      %p28 = scmp.ge.s32.totalorder %s27, 1
      %s29 = scalar_select %p28, 0, %s27
      %s30 = ssub.s32 %s17, %s29
      %s31 = ssub.s32 %s18, %s25
      %s32 = sor.u32 %s30, %s31
      %p33 = scmp.eq.s32.totalorder %s32, 0
      %s35 = sadd.s32 %s34, 1
      %s36 = scalar_select %p33, %s34, %s35
      %p39 = pneg %p33
      %p40 = scmp.eq.s32.totalorder %s10, 1
      %p41 = por %p39, %p40
      %p42 = scmp.ne.s32.totalorder %s34, %s37
      %p43 = scmp.eq.s32.totalorder %s10, 0
      %p44 = por %p42, %p43
      %p45 = scmp.ne.s32.totalorder %s34, %s37
      %p46 = scmp.eq.s32.totalorder %s15, 1
      %p47 = por %p45, %p46
      %p48 = scmp.ne.s32.totalorder %s37, %s38
      %p49 = scmp.eq.s32.totalorder %s15, 0
      %p50 = por %p48, %p49
      %p51 = scmp.ne.s32.totalorder %s37, %s38
      %p52 = scmp.eq.s32.totalorder %s16, 1
      %p53 = por %p51, %p52
      %p55 = scmp.ne.s32.totalorder %s38, %s54
      %p56 = scmp.eq.s32.totalorder %s16, 0
      %p57 = por %p55, %p56
      %s59 = sadd.s32 %s58, 1
      %p62 = scmp.eq.s32.totalorder %s10, 1
      %p63 = scmp.ne.s32.totalorder %s58, %s60
      %p64 = scmp.eq.s32.totalorder %s10, 0
      %p65 = por %p63, %p64
      %p66 = scmp.ne.s32.totalorder %s58, %s60
      %p67 = scmp.eq.s32.totalorder %s15, 1
      %p68 = por %p66, %p67
      %p69 = scmp.ne.s32.totalorder %s60, %s61
      %p70 = scmp.eq.s32.totalorder %s15, 0
      %p71 = por %p69, %p70
      %p72 = scmp.ne.s32.totalorder %s60, %s61
      %p73 = scmp.eq.s32.totalorder %s16, 1
      %p74 = por %p72, %p73
      %p76 = scmp.ne.s32.totalorder %s61, %s75
      %p77 = scmp.eq.s32.totalorder %s16, 0
      %p78 = por %p76, %p77
      %s80 = sadd.s32 %s79, 1
      %p83 = scmp.eq.s32.totalorder %s10, 1
      %p84 = scmp.ne.s32.totalorder %s79, %s81
      %p85 = scmp.eq.s32.totalorder %s10, 0
      %p86 = por %p84, %p85
      %p87 = scmp.ne.s32.totalorder %s79, %s81
      %p88 = scmp.eq.s32.totalorder %s15, 1
      %p89 = por %p87, %p88
      %p90 = scmp.ne.s32.totalorder %s81, %s82
      %p91 = scmp.eq.s32.totalorder %s15, 0
      %p92 = por %p90, %p91
      %p93 = scmp.ne.s32.totalorder %s81, %s82
      %p94 = scmp.eq.s32.totalorder %s16, 1
      %p95 = por %p93, %p94
      %p97 = scmp.ne.s32.totalorder %s82, %s96
      %p98 = scmp.eq.s32.totalorder %s16, 0
      %p99 = por %p97, %p98
      %s100 = ssub.s32 %s17, %s29
      %p101 = scmp.eq.s32.totalorder %s100, 0
      %s103 = sadd.s32 %s102, 1
      %s104 = scalar_select %p101, %s102, %s103
      %p107 = pneg %p101
      %p108 = scmp.eq.s32.totalorder %s10, 1
      %p109 = por %p107, %p108
      %p110 = scmp.ne.s32.totalorder %s102, %s105
      %p111 = scmp.eq.s32.totalorder %s10, 0
      %p112 = por %p110, %p111
      %p113 = scmp.ne.s32.totalorder %s102, %s105
      %p114 = scmp.eq.s32.totalorder %s15, 1
      %p115 = por %p113, %p114
      %p116 = scmp.ne.s32.totalorder %s105, %s106
      %p117 = scmp.eq.s32.totalorder %s15, 0
      %p118 = por %p116, %p117
      %p119 = scmp.ne.s32.totalorder %s105, %s106
      %p120 = scmp.eq.s32.totalorder %s16, 1
      %p121 = por %p119, %p120
      %p123 = scmp.ne.s32.totalorder %s106, %s122
      %p124 = scmp.eq.s32.totalorder %s16, 0
      %p125 = por %p123, %p124
      %p126 = scmp.le.s32.totalorder 1, %s10
      %p127 = scmp.lt.s32.totalorder %s10, 3
      %p128 = pnand %p126, %p127
      %p129 = pneg %p128
      // Predicated region
      $region9: #{tpu_custom_call.1} parent=5 // pred_check
        _
      $region10: #{tpu_custom_call.1} parent=5 // pred_check_branch
        %131 = sbr.rel (%p128) target = $region12
      $region11: #{tpu_custom_call.1} parent=5 // pred_region
        %s132 = ssub.s32 %s10, 1
        // Predicated region
        $region13: #{tpu_custom_call.1} parent=11 // pred_check
          %p133 = pneg %p71
        $region14: #{tpu_custom_call.1} parent=11 // pred_check_branch
          %135 = sbr.rel (%p133) target = $region16
        $region15: #{tpu_custom_call.1} parent=11 // pred_region
          _
        $region16: #{tpu_custom_call.1} parent=11 // pred_fallthru
          _
        // Predicated region
        $region17: #{tpu_custom_call.1} parent=11 // pred_check
          %p136 = pneg %p92
        $region18: #{tpu_custom_call.1} parent=11 // pred_check_branch
          %138 = sbr.rel (%p136) target = $region20
        $region19: #{tpu_custom_call.1} parent=11 // pred_region
          _
        $region20: #{tpu_custom_call.1} parent=11 // pred_fallthru
          _
      $region12: #{tpu_custom_call.1} parent=5 // pred_fallthru
        _
      %p139 = scmp.lt.s32.totalorder %s10, 2
      // Predicated region
      $region21: #{tpu_custom_call.1} parent=5 // pred_check
        %p140 = pneg %p139
      $region22: #{tpu_custom_call.1} parent=5 // pred_check_branch
        %142 = sbr.rel (%p140) target = $region24
      $region23: #{tpu_custom_call.1} parent=5 // pred_region
        // Predicated region
        $region25: #{tpu_custom_call.1} parent=23 // pred_check
          %p143 = pneg %p44
        $region26: #{tpu_custom_call.1} parent=23 // pred_check_branch
          %145 = sbr.rel (%p143) target = $region28
        $region27: #{tpu_custom_call.1} parent=23 // pred_region
          %s146 = sand.u32 %s34, 1
          %s147 = sand.u32 %s34, 1
          %s148 = smul.addr %s147, 16
          %s149 = scalar_lea.vmem [#allocation3], %s148
          %s150 = smul.u32 2, %s17
          %s151 = smul.addr %s150, 2
          %s152 = sadd.s32 %s18, %s151
          %s153 = smul.addr %s152, 8
          %s154 = scalar_lea.vmem %s0, %s153
          // Predicated region
          $region29: #{tpu_custom_call.1} parent=27 // pred_check
            _
          $region30: #{tpu_custom_call.1} parent=27 // pred_check_branch
            %156 = sbr.rel (0) target = $region32
          $region31: #{tpu_custom_call.1} parent=27 // pred_region
            // Predicated region
            $region33: #{tpu_custom_call.1} parent=31 // pred_check
              _
            $region34: #{tpu_custom_call.1} parent=31 // pred_check_branch
              %158 = sbr.rel (0) target = $region36
            $region35: #{tpu_custom_call.1} parent=31 // pred_region
              // Predicated region
              $region48: #{tpu_custom_call.1} parent=35 // pred_check
                _
              $region49: #{tpu_custom_call.1} parent=35 // pred_check_branch
                %176 = sbr.rel (0) target = $region51
              $region50: #{tpu_custom_call.1} parent=35 // pred_region
                loop: start=0, step=1, limit=1
                $region52: #{tpu_custom_call.1} parent=50 // loop_pre_header
                  _
                $region53: #{tpu_custom_call.1} parent=50 // loop_header
                  %s178 = sphi 0, %s182
                  %p179 = scmp.ge.s32.totalorder %s178, 1
                  %s183 = sphi %s154, %s154
                  %s184 = sphi %s149, %s149
                $region54: #{tpu_custom_call.1} parent=50 // loop_header_branch
                  %181 = sbr.rel (%p179) target = $region58
                $region55: #{tpu_custom_call.1} parent=50 // loop_body
                  %v185 = vld [vmem:[%s183] sm:$0xff]
                  %186 = vst [vmem:[%s184] sm:$0xff] %v185
                  %v187 = vld [vmem:[%s183 + $0x10] sm:$0xff]
                  %188 = vst [vmem:[%s184 + $0x8] sm:$0xff] %v187
                $region56: #{tpu_custom_call.1} parent=50 // loop_footer
                  %s182 = sadd.s32 1, %s178
                $region57: #{tpu_custom_call.1} parent=50 // loop_footer_branch
                  %177 = sbr.rel target = $region53
                $region58: #{tpu_custom_call.1} parent=50 // loop_exit
                  _
              $region51: #{tpu_custom_call.1} parent=35 // pred_fallthru
                _
              // Predicated region
              $region59: #{tpu_custom_call.1} parent=35 // pred_check
                _
              $region60: #{tpu_custom_call.1} parent=35 // pred_check_branch
                %190 = sbr.rel target = $region62
              $region61: #{tpu_custom_call.1} parent=35 // pred_region
                _
              $region62: #{tpu_custom_call.1} parent=35 // pred_fallthru
                _
            $region36: #{tpu_custom_call.1} parent=31 // pred_fallthru
              _
            // Predicated region
            $region37: #{tpu_custom_call.1} parent=31 // pred_check
              _
            $region38: #{tpu_custom_call.1} parent=31 // pred_check_branch
              %160 = sbr.rel target = $region40
            $region39: #{tpu_custom_call.1} parent=31 // pred_region
              %s162 = ssub.s32 256, 1
              loop: start=0, step=1, limit=1
              $region41: #{tpu_custom_call.1} parent=39 // loop_pre_header
                _
              $region42: #{tpu_custom_call.1} parent=39 // loop_header
                %s164 = sphi 0, %s168
                %p165 = scmp.ge.s32.totalorder %s164, 1
                %s169 = sphi %s154, %s154
                %s170 = sphi %s149, %s149
              $region43: #{tpu_custom_call.1} parent=39 // loop_header_branch
                %167 = sbr.rel (%p165) target = $region47
              $region44: #{tpu_custom_call.1} parent=39 // loop_body
                %v171 = vld [vmem:[%s169] sm:%s162]
                %172 = vst [vmem:[%s170] sm:%s162] %v171
                %v173 = vld [vmem:[%s169 + $0x10] sm:%s162]
                %174 = vst [vmem:[%s170 + $0x8] sm:%s162] %v173
              $region45: #{tpu_custom_call.1} parent=39 // loop_footer
                %s168 = sadd.s32 1, %s164
              $region46: #{tpu_custom_call.1} parent=39 // loop_footer_branch
                %163 = sbr.rel target = $region42
              $region47: #{tpu_custom_call.1} parent=39 // loop_exit
                _
            $region40: #{tpu_custom_call.1} parent=31 // pred_fallthru
              _
          $region32: #{tpu_custom_call.1} parent=27 // pred_fallthru
            _
          %191 = vnop
        $region28: #{tpu_custom_call.1} parent=23 // pred_fallthru
          _
      $region24: #{tpu_custom_call.1} parent=5 // pred_fallthru
        _
      %p192 = scmp.le.s32.totalorder 1, %s10
      %p193 = scmp.lt.s32.totalorder %s10, 3
      %p194 = pnand %p192, %p193
      %p195 = pneg %p194
      // Predicated region
      $region63: #{tpu_custom_call.1} parent=5 // pred_check
        _
      $region64: #{tpu_custom_call.1} parent=5 // pred_check_branch
        %197 = sbr.rel (%p194) target = $region66
      $region65: #{tpu_custom_call.1} parent=5 // pred_region
        %s198 = ssub.s32 %s10, 1
        %s199 = sand.u32 %s37, 1
        %s200 = sand.u32 %s37, 1
        %s201 = smul.addr %s200, 16
        %s202 = scalar_lea.vmem [#allocation3], %s201
        // Predicated region
        $region67: #{tpu_custom_call.1} parent=65 // pred_check
          %p203 = pneg %p50
        $region68: #{tpu_custom_call.1} parent=65 // pred_check_branch
          %205 = sbr.rel (%p203) target = $region70
        $region69: #{tpu_custom_call.1} parent=65 // pred_region
          _
        $region70: #{tpu_custom_call.1} parent=65 // pred_fallthru
          _
        %s206 = sand.u32 %s37, 1
        %s207 = sand.u32 %s37, 1
        %s208 = smul.addr %s207, 16
        %s209 = scalar_lea.vmem [#allocation3], %s208
        %p210 = pneg %p50
        %p211 = pneg %p47
        %p212 = pneg %p71
        %p213 = pneg %p68
        %p214 = pneg %p92
        %p215 = pneg %p89
        %p216 = pneg %p118
        %p217 = pneg %p115
        %s218 = smul.u32 2, %s19
        %p219 = scmp.eq.s32.totalorder %s20, 0
        // Predicated region
        $region71: #{tpu_custom_call.1} parent=65 // pred_check
          %p220 = pneg %p219
        $region72: #{tpu_custom_call.1} parent=65 // pred_check_branch
          %222 = sbr.rel (%p220) target = $region74
        $region73: #{tpu_custom_call.1} parent=65 // pred_region
          %vm223 = vcmask 261120
          %224 = vst.msk [vmem:[#allocation2] sm:$0xff] %vm223, 0.0
          %225 = vst.msk [vmem:[#allocation2 + $0x8] sm:$0xff] %vm223, 0.0
        $region74: #{tpu_custom_call.1} parent=65 // pred_fallthru
          _
        %v226 = vld [vmem:[%s202] sm:$0xff]
        %v227 = vld [vmem:[%s202 + $0x8] sm:$0xff]
        %v228 = vld [vmem:[#allocation2] sm:$0xff]
        %v229 = vld [vmem:[#allocation2 + $0x8] sm:$0xff]
        %v230 = vadd.f32 %v226, 0.0
        %v231 = vadd.f32 %v227, 0.0
        %v232 = vadd.f32 %v228, %v230
        %v233 = vadd.f32 %v229, %v231
        %vm234 = vcmask 261120
        %235 = vst.msk [vmem:[#allocation2] sm:$0xff] %vm234, %v232
        %236 = vst.msk [vmem:[#allocation2 + $0x8] sm:$0xff] %vm234, %v233
        %p237 = scmp.eq.s32.totalorder %s20, 1
        // Predicated region
        $region75: #{tpu_custom_call.1} parent=65 // pred_check
          %p238 = pneg %p237
        $region76: #{tpu_custom_call.1} parent=65 // pred_check_branch
          %240 = sbr.rel (%p238) target = $region78
        $region77: #{tpu_custom_call.1} parent=65 // pred_region
          %v241 = vld [vmem:[#allocation2] sm:$0xff]
          %v242 = vld [vmem:[#allocation2 + $0x8] sm:$0xff]
          %v243 = vsel %vm234, %v241, 0.0
          %v244 = vrot.slane %v243, 4
          %v245 = vadd.f32 %v243, %v244
          %v246 = vrot.slane %v245, 2
          %v247 = vadd.f32 %v245, %v246
          %v248 = vrot.slane %v247, 1
          %v249 = vadd.f32 %v247, %v248
          %v250 = vsel %vm234, %v242, 0.0
          %v251 = vrot.slane %v250, 4
          %v252 = vadd.f32 %v250, %v251
          %v253 = vrot.slane %v252, 2
          %v254 = vadd.f32 %v252, %v253
          %v255 = vrot.slane %v254, 1
          %v256 = vadd.f32 %v254, %v255
          %v257 = vmul.f32 %v249, 0.0625
          %v258 = vmul.f32 %v256, 0.0625
          %v259 = vld [vmem:[%s1] sm:$0xff]
          %v260 = vld [vmem:[%s1 + $0x8] sm:$0xff]
          %v261 = vld [vmem:[%s1 + $0x10] sm:$0xff]
          %v262 = vld [vmem:[%s1 + $0x18] sm:$0xff]
          %v263 = vld [vmem:[%s2] sm:$0x1]
          %v265 = vperm.slane %v263, 0
          %vm269 = vcmask 1041409
          %v270 = vsel %vm269, %v258, %v257
          %v271 = vsel %vm234, %v270, 0
          %273 = vmatpush.msra.mxu0 0.0
          %274 = vmatpush.msra.mxu0 0.0
          %275 = vmatpush.msra.mxu0 0.0
          %276 = vmatpush.msra.mxu0 0.0
          %277 = vmatpush.msra.mxu0 0.0
          %278 = vmatpush.msra.mxu0 0.0
          %279 = vmatpush.msra.mxu0 0.0
          %280 = vmatpush.msra.mxu0 0.0
          %281 = vmatpush.msra.mxu0 0.0
          %282 = vmatpush.msra.mxu0 0.0
          %283 = vmatpush.msra.mxu0 0.0
          %284 = vmatpush.msra.mxu0 0.0
          %285 = vmatpush.msra.mxu0 %v262
          %286 = vmatpush.msra.mxu0 %v261
          %287 = vmatpush.msra.mxu0 %v260
          %288 = vmatpush.msra.mxu0 %v259
          %289 = vmatmul.f32.gmra.mxu0 %v271
          %v290 = vpop.f32.mrf.mxu0
          %v291 = vadd.f32 %v265, %v290
          %292 = vdwg.mxu0
          %vm293 = vcmask 25600
          %294 = vst.msk [vmem:[#allocation4] sm:$0x3] %vm293, %v291
        $region78: #{tpu_custom_call.1} parent=65 // pred_fallthru
          _
        // Predicated region
        $region79: #{tpu_custom_call.1} parent=65 // pred_check
          %p295 = pneg %p115
        $region80: #{tpu_custom_call.1} parent=65 // pred_check_branch
          %297 = sbr.rel (%p295) target = $region82
        $region81: #{tpu_custom_call.1} parent=65 // pred_region
          %299 = vsyncadd [#allocation5], 0
          %s300 = smul.addr %s19, 2
          %s301 = scalar_lea.hbm %s3, %s300
          %s303 = sshll.u32 [#allocation4], 4
          %s304 = int_to_ptr.vmem [resolvable:$true] %s303
          %s305 = sshll.u32 %s301, 4
          %s306 = int_to_ptr.hbm [resolvable:$true] %s305
          %308 = dma.vmem_to_hbm [thread:$0]  %s304, 32, %s306, [#allocation5]
        $region82: #{tpu_custom_call.1} parent=65 // pred_fallthru
          _
        // Predicated region
        $region83: #{tpu_custom_call.1} parent=65 // pred_check
          %p309 = pneg %p115
        $region84: #{tpu_custom_call.1} parent=65 // pred_check_branch
          %311 = sbr.rel (%p309) target = $region86
        $region85: #{tpu_custom_call.1} parent=65 // pred_region
          %313 = dma.done [#allocation5], 32
        $region86: #{tpu_custom_call.1} parent=65 // pred_fallthru
          _
      $region66: #{tpu_custom_call.1} parent=5 // pred_fallthru
        _
      %p314 = scmp.le.s32.totalorder 2, %s10
      // Predicated region
      $region87: #{tpu_custom_call.1} parent=5 // pred_check
        %p315 = pneg %p314
      $region88: #{tpu_custom_call.1} parent=5 // pred_check_branch
        %317 = sbr.rel (%p315) target = $region90
      $region89: #{tpu_custom_call.1} parent=5 // pred_region
        %s318 = ssub.s32 %s10, 2
      $region90: #{tpu_custom_call.1} parent=5 // pred_fallthru
        _
    $region6: #{tpu_custom_call.1} parent=1 // loop_footer
      %s14 = sadd.s32 1, %s10
    $region7: #{tpu_custom_call.1} parent=1 // loop_footer_branch
      %9 = sbr.rel target = $region3
    $region8: #{tpu_custom_call.1} parent=1 // loop_exit
      _
    %319 = vsyncpa [#allocation5], 1
    %s320 = scalar_lea.sflag [#allocation5], 1
    %321 = vsyncpa %s320, 1

</llo_original>
